<compile_context>
chip_gen: v6e
topology: v6e:2x2x1
jax: 0.10.0
libtpu: 0.0.40
codegen_flags: <defaults>
</compile_context>

<pallas_src>
import jax
import jax.numpy as jnp
from jax import lax
from jax.experimental import pallas as pl
from jax.experimental.pallas import tpu as pltpu

block_size = 8      # T
n_embd = 4          # C
head_size = 4       # H
dropout_p = 0.2     # eval-mode => identity (see TODO below)


def head_kernel(x_ref, wqkv_ref, o_ref):
    """Single invocation: whole (B, T, C) batch resident in VMEM."""
    x = x_ref[...].astype(jnp.float32)            # (B, T, C)
    w = wqkv_ref[...].astype(jnp.float32)         # (C, 3H)
    B, T, C = x.shape
    H = w.shape[1] // 3

    # Fused QKV projection: one batched matmul instead of 3*B tiny ones.
    w_b = jnp.broadcast_to(w[None], (B, C, 3 * H))                 # (B, C, 3H)
    qkv = jnp.einsum('btc,bcd->btd', x, w_b,
                     preferred_element_type=jnp.float32)           # (B, T, 3H)
    q = qkv[:, :, 0 * H:1 * H]
    k = qkv[:, :, 1 * H:2 * H]
    v = qkv[:, :, 2 * H:3 * H]

    # wei = q @ k^T * head_size^{-0.5}   -> (B, T, T)
    scale = jnp.float32(H ** -0.5)
    wei = jnp.einsum('btd,bsd->bts', q, k,
                     preferred_element_type=jnp.float32) * scale

    # Causal mask built in-kernel (keep positions where row >= col).
    row = lax.broadcasted_iota(jnp.int32, (T, T), 0)
    col = lax.broadcasted_iota(jnp.int32, (T, T), 1)
    causal = (row >= col)[None, :, :]                              # (1, T, T)
    wei = jnp.where(causal, wei, jnp.float32(-1e30))

    # Numerically-stable softmax along the last axis; the reciprocal goes to
    # the EUP slot (approx=True), which is otherwise idle here.
    m = jnp.max(wei, axis=-1, keepdims=True)
    e = jnp.exp(wei - m)
    p = e * pl.reciprocal(jnp.sum(e, axis=-1, keepdims=True), approx=True)

    # TODO(synk): nn.Dropout(p=0.2) is identity in eval mode; training-mode
    # stochastic dropout (pltpu.prng_*) intentionally omitted for determinism.

    out = jnp.einsum('bts,bsd->btd', p, v,
                     preferred_element_type=jnp.float32)           # (B, T, H)

    # NOTE: with H=4 the output store is a masked partial vst (4/128 lanes);
    # at real sizes pack multiple heads / pad H to a multiple of 128 to make
    # this lane-dense.
    o_ref[...] = out.astype(o_ref.dtype)


def head_forward(x, w_qkv):
    """x: (B, T, C) f32; w_qkv: (C, 3H) packed [Wq | Wk | Wv]. Returns (B, T, H)."""
    B, T, C = x.shape
    H = w_qkv.shape[1] // 3
    return pl.pallas_call(
        head_kernel,
        out_shape=jax.ShapeDtypeStruct((B, T, H), jnp.float32),
        in_specs=[
            pl.BlockSpec(memory_space=pltpu.MemorySpace.VMEM),   # x (whole array)
            pl.BlockSpec(memory_space=pltpu.MemorySpace.VMEM),   # packed W_qkv
        ],
        out_specs=pl.BlockSpec(memory_space=pltpu.MemorySpace.VMEM),
    )(x, w_qkv)


def head_reference(x, w_query, w_key, w_value):
    """Plain-JAX reference mirroring the PyTorch forward (eval mode)."""
    q = x @ w_query
    k = x @ w_key
    v = x @ w_value
    T = x.shape[1]
    wei = (q @ jnp.swapaxes(k, -2, -1)) * (k.shape[-1] ** -0.5)
    tril = jnp.tril(jnp.ones((T, T), dtype=jnp.float32))
    wei = jnp.where(tril[None, :, :] == 0, -jnp.inf, wei)
    wei = jax.nn.softmax(wei, axis=-1)
    return wei @ v


if __name__ == "__main__":
    key = jax.random.PRNGKey(0)
    k_x, k_k, k_q, k_v = jax.random.split(key, 4)

    B, T, C, H = 2, block_size, n_embd, head_size

    # Deterministic synthetic inputs / parameters.
    x = jax.random.normal(k_x, (B, T, C), dtype=jnp.float32)
    # nn.Linear(n_embd, head_size, bias=False) weight is (H, C); store transposed (C, H).
    w_key = (jax.random.normal(k_k, (H, C), dtype=jnp.float32) / jnp.sqrt(C)).T
    w_query = (jax.random.normal(k_q, (H, C), dtype=jnp.float32) / jnp.sqrt(C)).T
    w_value = (jax.random.normal(k_v, (H, C), dtype=jnp.float32) / jnp.sqrt(C)).T
    # Pack as [Q | K | V] along the output dim -> (C, 3H).
    w_qkv = jnp.concatenate([w_query, w_key, w_value], axis=1)

    out = head_forward(x, w_qkv)
    out = jax.block_until_ready(out)

    ref = head_reference(x, w_query, w_key, w_value)
    assert out.shape == (B, T, H)
    # Tolerance accounts for pl.reciprocal(approx=True) in the softmax
    # denominator (~bf16-level relative error at worst).
    assert jnp.allclose(out, ref, atol=5e-3, rtol=5e-3), "mismatch vs JAX reference"

    print("KERNEL_OK")
</pallas_src>

<mosaic_0001>
module attributes {stable_mosaic.version = 11 : i64} {
  func.func @head_kernel(%arg0: memref<2x8x4xf32, #tpu.memory_space<vmem>>, %arg1: memref<4x12xf32, #tpu.memory_space<vmem>>, %arg2: memref<2x8x4xf32, #tpu.memory_space<vmem>>) attributes {dimension_semantics = [], scalar_prefetch = 0 : i64, scratch_operands = 0 : i64, tpu.core_type = #tpu.core_type<tc>} {
    %c0 = arith.constant 0 : index
    %c0_0 = arith.constant 0 : index
    %c0_1 = arith.constant 0 : index
    %0 = vector.load %arg0[%c0, %c0_0, %c0_1] : memref<2x8x4xf32, #tpu.memory_space<vmem>>, vector<2x8x4xf32>
    %c0_2 = arith.constant 0 : index
    %c0_3 = arith.constant 0 : index
    %1 = vector.load %arg1[%c0_2, %c0_3] : memref<4x12xf32, #tpu.memory_space<vmem>>, vector<4x12xf32>
    %2 = vector.shape_cast %1 : vector<4x12xf32> to vector<1x4x12xf32>
    %3 = vector.shape_cast %2 : vector<1x4x12xf32> to vector<1x4x12xf32>
    %4 = vector.broadcast %3 : vector<1x4x12xf32> to vector<2x4x12xf32>
    "tpu.trace_start"() <{level = 10 : i32, message = "btc,bcd->btd"}> : () -> ()
    %cst = arith.constant dense<0.000000e+00> : vector<2x8x12xf32>
    %5 = tpu.matmul %0, %4, %cst {dimension_numbers = #tpu.dot_dimension_numbers<[2], [1], [1], [2], [0, 0, 0, 1, 1, 2], [0], [0]>} : vector<2x8x4xf32>, vector<2x4x12xf32>, vector<2x8x12xf32> -> vector<2x8x12xf32>
    "tpu.trace_stop"() : () -> ()
    %6 = vector.extract_strided_slice %5 {offsets = [0, 0, 0], sizes = [2, 8, 4], strides = [1, 1, 1]} : vector<2x8x12xf32> to vector<2x8x4xf32>
    %7 = vector.extract_strided_slice %5 {offsets = [0, 0, 4], sizes = [2, 8, 4], strides = [1, 1, 1]} : vector<2x8x12xf32> to vector<2x8x4xf32>
    %8 = vector.extract_strided_slice %5 {offsets = [0, 0, 8], sizes = [2, 8, 4], strides = [1, 1, 1]} : vector<2x8x12xf32> to vector<2x8x4xf32>
    "tpu.trace_start"() <{level = 10 : i32, message = "btd,bsd->bts"}> : () -> ()
    %cst_4 = arith.constant dense<0.000000e+00> : vector<2x8x8xf32>
    %9 = tpu.matmul %6, %7, %cst_4 {dimension_numbers = #tpu.dot_dimension_numbers<[2], [2], [1], [1], [0, 0, 0, 1, 1, 1], [0], [0]>} : vector<2x8x4xf32>, vector<2x8x4xf32>, vector<2x8x8xf32> -> vector<2x8x8xf32>
    "tpu.trace_stop"() : () -> ()
    %cst_5 = arith.constant 5.000000e-01 : f32
    %10 = vector.broadcast %cst_5 : f32 to vector<2x8x8xf32>
    %11 = arith.mulf %9, %10 : vector<2x8x8xf32>
    %12 = tpu.iota {dimensions = array<i32: 0>} : vector<8x8xi32>
    %13 = tpu.iota {dimensions = array<i32: 1>} : vector<8x8xi32>
    %14 = arith.cmpi sge, %12, %13 : vector<8x8xi32>
    %15 = vector.shape_cast %14 : vector<8x8xi1> to vector<1x8x8xi1>
    %cst_6 = arith.constant -1.000000e+30 : f32
    %16 = vector.shape_cast %15 : vector<1x8x8xi1> to vector<1x8x8xi1>
    %17 = vector.broadcast %16 : vector<1x8x8xi1> to vector<2x8x8xi1>
    %18 = vector.broadcast %cst_6 : f32 to vector<2x8x8xf32>
    %19 = arith.select %17, %11, %18 : vector<2x8x8xi1>, vector<2x8x8xf32>
    %cst_7 = arith.constant dense<0xFF800000> : vector<2x8xf32>
    %20 = vector.multi_reduction <maximumf>, %19, %cst_7 [2] : vector<2x8x8xf32> to vector<2x8xf32>
    %21 = vector.shape_cast %20 : vector<2x8xf32> to vector<2x8x1xf32>
    %22 = vector.broadcast %21 : vector<2x8x1xf32> to vector<2x8x8xf32>
    %23 = arith.subf %19, %22 : vector<2x8x8xf32>
    %24 = math.exp %23 : vector<2x8x8xf32>
    %cst_8 = arith.constant dense<0.000000e+00> : vector<2x8xf32>
    %25 = vector.multi_reduction <add>, %24, %cst_8 [2] : vector<2x8x8xf32> to vector<2x8xf32>
    %26 = vector.shape_cast %25 : vector<2x8xf32> to vector<2x8x1xf32>
    %27 = tpu.reciprocal %26 {approx = true} : vector<2x8x1xf32> -> vector<2x8x1xf32>
    %28 = vector.broadcast %27 : vector<2x8x1xf32> to vector<2x8x8xf32>
    %29 = arith.mulf %24, %28 : vector<2x8x8xf32>
    "tpu.trace_start"() <{level = 10 : i32, message = "bts,bsd->btd"}> : () -> ()
    %cst_9 = arith.constant dense<0.000000e+00> : vector<2x8x4xf32>
    %30 = tpu.matmul %29, %8, %cst_9 {dimension_numbers = #tpu.dot_dimension_numbers<[2], [1], [1], [2], [0, 0, 0, 1, 1, 2], [0], [0]>} : vector<2x8x8xf32>, vector<2x8x4xf32>, vector<2x8x4xf32> -> vector<2x8x4xf32>
    "tpu.trace_stop"() : () -> ()
    %c0_10 = arith.constant 0 : index
    %c0_11 = arith.constant 0 : index
    %c0_12 = arith.constant 0 : index
    %31 = vector.load %arg2[%c0_10, %c0_11, %c0_12] : memref<2x8x4xf32, #tpu.memory_space<vmem>>, vector<2x8x4xf32>
    tpu.vector_store %arg2[%c0_10, %c0_11, %c0_12], %30 {strides = array<i32>} : memref<2x8x4xf32, #tpu.memory_space<vmem>>, vector<2x8x4xf32>,
    return
  }
}

</mosaic_0001>

<llo_original>
// kernel: tpu_custom_call.1
$region0: #{tpu_custom_call.1}
  #allocation0 [shape = 'u32[]', space=smem, size = 0x4, offset = 0x4, fixed_abs, tag = 'smem constant byte address 0x4 - core index']
  #allocation1 [shape = 'u32[144,128]{1,0:T(1,128)}', space=vmem, size = 0x12000, scoped, tag = 'internal scratch']
  %s0 = inlined_call_operand.vmem [shape: f32[2,8,4], index: 0, kind: input, shape index: {}]
  %s1 = inlined_call_operand.vmem [shape: f32[4,12], index: 1, kind: input, shape index: {}]
  %s2 = inlined_call_operand.vmem [shape: f32[2,8,4], index: 2, kind: output, shape index: {}]
  %s3 = sld [smem:[#allocation0]]
  $region18: #{tpu_custom_call.1} parent=0
    _
  %s5 = ssub.s32 1, %s3
  %s6 = scalar_select 0, %s5, %s3
  // Predicated region
  $region2: #{tpu_custom_call.1} parent=0 // pred_check
    _
  $region3: #{tpu_custom_call.1} parent=0 // pred_check_branch
    %8 = sbr.rel (0) target = $region5
  $region4: #{tpu_custom_call.1} parent=0 // pred_region
    _
  $region5: #{tpu_custom_call.1} parent=0 // pred_fallthru
    _
  // Predicated region
  $region6: #{tpu_custom_call.1} parent=0 // pred_check
    _
  $region7: #{tpu_custom_call.1} parent=0 // pred_check_branch
    %10 = sbr.rel (0) target = $region9
  $region8: #{tpu_custom_call.1} parent=0 // pred_region
    _
  $region9: #{tpu_custom_call.1} parent=0 // pred_fallthru
    _
  %v11 = vld [vmem:[%s0] sm:$0xff]
  %v12 = vld [vmem:[%s0 + $0x8] sm:$0xff]
  %v13 = vld [vmem:[%s1] sm:$0xf]
  %vm14 = vcmask 31744
  %v16 = vsel %vm14, %v11, 0
  %vm18 = vcmask 1043456
  %v20 = vsel %vm18, %v13, 0
  %22 = vmatprep.subr.mxu0 0.0
  %23 = vmatpush1.msra.mxu0 0.0
  %24 = vmatprep.subr.mxu0 0.0
  %25 = vmatpush1.msra.mxu0 0.0
  %26 = vmatprep.subr.mxu0 0.0
  %27 = vmatpush1.msra.mxu0 0.0
  %28 = vmatprep.subr.mxu0 0.0
  %29 = vmatpush1.msra.mxu0 0.0
  %30 = vmatprep.subr.mxu0 0.0
  %31 = vmatpush1.msra.mxu0 0.0
  %32 = vmatprep.subr.mxu0 0.0
  %33 = vmatpush1.msra.mxu0 0.0
  %34 = vmatprep.subr.mxu0 0.0
  %35 = vmatpush1.msra.mxu0 0.0
  %36 = vmatprep.subr.mxu0 0.0
  %37 = vmatpush1.msra.mxu0 0.0
  %38 = vmatprep.subr.mxu0 0.0
  %39 = vmatpush1.msra.mxu0 0.0
  %40 = vmatprep.subr.mxu0 0.0
  %41 = vmatpush1.msra.mxu0 0.0
  %42 = vmatprep.subr.mxu0 0.0
  %43 = vmatpush1.msra.mxu0 0.0
  %44 = vmatprep.subr.mxu0 0.0
  %45 = vmatpush1.msra.mxu0 0.0
  %46 = vmatprep.subr.mxu0 0.0
  %47 = vmatpush1.msra.mxu0 0.0
  %48 = vmatprep.subr.mxu0 0.0
  %49 = vmatpush1.msra.mxu0 0.0
  %50 = vmatprep.subr.mxu0 0.0
  %51 = vmatpush1.msra.mxu0 0.0
  %52 = vmatprep.subr.mxu0 0.0
  %53 = vmatpush1.msra.mxu0 %v20
  %54 = vmatprep.subr.mxu0 0.0
  %55 = vmatpush2.msra.mxu0 0.0
  %56 = vmatprep.subr.mxu0 0.0
  %57 = vmatpush2.msra.mxu0 0.0
  %58 = vmatprep.subr.mxu0 0.0
  %59 = vmatpush2.msra.mxu0 0.0
  %60 = vmatprep.subr.mxu0 0.0
  %61 = vmatpush2.msra.mxu0 0.0
  %62 = vmatprep.subr.mxu0 0.0
  %63 = vmatpush2.msra.mxu0 0.0
  %64 = vmatprep.subr.mxu0 0.0
  %65 = vmatpush2.msra.mxu0 0.0
  %66 = vmatprep.subr.mxu0 0.0
  %67 = vmatpush2.msra.mxu0 0.0
  %68 = vmatprep.subr.mxu0 0.0
  %69 = vmatpush2.msra.mxu0 0.0
  %70 = vmatprep.subr.mxu0 0.0
  %71 = vmatpush2.msra.mxu0 0.0
  %72 = vmatprep.subr.mxu0 0.0
  %73 = vmatpush2.msra.mxu0 0.0
  %74 = vmatprep.subr.mxu0 0.0
  %75 = vmatpush2.msra.mxu0 0.0
  %76 = vmatprep.subr.mxu0 0.0
  %77 = vmatpush2.msra.mxu0 0.0
  %78 = vmatprep.subr.mxu0 0.0
  %79 = vmatpush2.msra.mxu0 0.0
  %80 = vmatprep.subr.mxu0 0.0
  %81 = vmatpush2.msra.mxu0 0.0
  %82 = vmatprep.subr.mxu0 0.0
  %83 = vmatpush2.msra.mxu0 0.0
  %84 = vmatprep.subr.mxu0 0.0
  %85 = vmatpush2.msra.mxu0 0.0
  %86 = vmatprep.mubr.f32.mxu0 0.0
  %87 = vmatmul.mubr.f32.gmra.mxu0 %v16
  %v88 = vpop.f32.mrf.mxu0
  %v89 = vadd.f32 0.0, %v88
  %v90 = vpop.f32.mrf.mxu0
  %91 = vdwg.mxu0
  %v93 = vsel %vm14, %v12, 0
  %95 = vmatprep.subr.mxu0 0.0
  %96 = vmatpush1.msra.mxu0 0.0
  %97 = vmatprep.subr.mxu0 0.0
  %98 = vmatpush1.msra.mxu0 0.0
  %99 = vmatprep.subr.mxu0 0.0
  %100 = vmatpush1.msra.mxu0 0.0
  %101 = vmatprep.subr.mxu0 0.0
  %102 = vmatpush1.msra.mxu0 0.0
  %103 = vmatprep.subr.mxu0 0.0
  %104 = vmatpush1.msra.mxu0 0.0
  %105 = vmatprep.subr.mxu0 0.0
  %106 = vmatpush1.msra.mxu0 0.0
  %107 = vmatprep.subr.mxu0 0.0
  %108 = vmatpush1.msra.mxu0 0.0
  %109 = vmatprep.subr.mxu0 0.0
  %110 = vmatpush1.msra.mxu0 0.0
  %111 = vmatprep.subr.mxu0 0.0
  %112 = vmatpush1.msra.mxu0 0.0
  %113 = vmatprep.subr.mxu0 0.0
  %114 = vmatpush1.msra.mxu0 0.0
  %115 = vmatprep.subr.mxu0 0.0
  %116 = vmatpush1.msra.mxu0 0.0
  %117 = vmatprep.subr.mxu0 0.0
  %118 = vmatpush1.msra.mxu0 0.0
  %119 = vmatprep.subr.mxu0 0.0
  %120 = vmatpush1.msra.mxu0 0.0
  %121 = vmatprep.subr.mxu0 0.0
  %122 = vmatpush1.msra.mxu0 0.0
  %123 = vmatprep.subr.mxu0 0.0
  %124 = vmatpush1.msra.mxu0 0.0
  %125 = vmatprep.subr.mxu0 0.0
  %126 = vmatpush1.msra.mxu0 %v20
  %127 = vmatprep.subr.mxu0 0.0
  %128 = vmatpush2.msra.mxu0 0.0
  %129 = vmatprep.subr.mxu0 0.0
  %130 = vmatpush2.msra.mxu0 0.0
  %131 = vmatprep.subr.mxu0 0.0
  %132 = vmatpush2.msra.mxu0 0.0
  %133 = vmatprep.subr.mxu0 0.0
  %134 = vmatpush2.msra.mxu0 0.0
  %135 = vmatprep.subr.mxu0 0.0
  %136 = vmatpush2.msra.mxu0 0.0
  %137 = vmatprep.subr.mxu0 0.0
  %138 = vmatpush2.msra.mxu0 0.0
  %139 = vmatprep.subr.mxu0 0.0
  %140 = vmatpush2.msra.mxu0 0.0
  %141 = vmatprep.subr.mxu0 0.0
  %142 = vmatpush2.msra.mxu0 0.0
  %143 = vmatprep.subr.mxu0 0.0
  %144 = vmatpush2.msra.mxu0 0.0
  %145 = vmatprep.subr.mxu0 0.0
  %146 = vmatpush2.msra.mxu0 0.0
  %147 = vmatprep.subr.mxu0 0.0
  %148 = vmatpush2.msra.mxu0 0.0
  %149 = vmatprep.subr.mxu0 0.0
  %150 = vmatpush2.msra.mxu0 0.0
  %151 = vmatprep.subr.mxu0 0.0
  %152 = vmatpush2.msra.mxu0 0.0
  %153 = vmatprep.subr.mxu0 0.0
  %154 = vmatpush2.msra.mxu0 0.0
  %155 = vmatprep.subr.mxu0 0.0
  %156 = vmatpush2.msra.mxu0 0.0
  %157 = vmatprep.subr.mxu0 0.0
  %158 = vmatpush2.msra.mxu0 0.0
  %159 = vmatprep.mubr.f32.mxu0 0.0
  %160 = vmatmul.mubr.f32.gmra.mxu0 %v93
  %v161 = vpop.f32.mrf.mxu0
  %v162 = vadd.f32 0.0, %v161
  %v163 = vpop.f32.mrf.mxu0
  %164 = vdwg.mxu0
  %166 = vrot.lane.b32.xlu0 %v89, 124
  %v167 = vpop.permute.xlu0 %166
  %v168 = vsel %vm14, %v89, 0
  %v170 = vsel %vm14, %v167, 0
  %172 = vmatprep.subr.mxu0 0.0
  %173 = vmatpush1.xpose.msra.mxu0 0.0
  %174 = vmatprep.subr.mxu0 0.0
  %175 = vmatpush1.xpose.msra.mxu0 0.0
  %176 = vmatprep.subr.mxu0 0.0
  %177 = vmatpush1.xpose.msra.mxu0 0.0
  %178 = vmatprep.subr.mxu0 0.0
  %179 = vmatpush1.xpose.msra.mxu0 0.0
  %180 = vmatprep.subr.mxu0 0.0
  %181 = vmatpush1.xpose.msra.mxu0 0.0
  %182 = vmatprep.subr.mxu0 0.0
  %183 = vmatpush1.xpose.msra.mxu0 0.0
  %184 = vmatprep.subr.mxu0 0.0
  %185 = vmatpush1.xpose.msra.mxu0 0.0
  %186 = vmatprep.subr.mxu0 0.0
  %187 = vmatpush1.xpose.msra.mxu0 0.0
  %188 = vmatprep.subr.mxu0 0.0
  %189 = vmatpush1.xpose.msra.mxu0 0.0
  %190 = vmatprep.subr.mxu0 0.0
  %191 = vmatpush1.xpose.msra.mxu0 0.0
  %192 = vmatprep.subr.mxu0 0.0
  %193 = vmatpush1.xpose.msra.mxu0 0.0
  %194 = vmatprep.subr.mxu0 0.0
  %195 = vmatpush1.xpose.msra.mxu0 0.0
  %196 = vmatprep.subr.mxu0 0.0
  %197 = vmatpush1.xpose.msra.mxu0 0.0
  %198 = vmatprep.subr.mxu0 0.0
  %199 = vmatpush1.xpose.msra.mxu0 0.0
  %200 = vmatprep.subr.mxu0 0.0
  %201 = vmatpush1.xpose.msra.mxu0 0.0
  %202 = vmatprep.subr.mxu0 0.0
  %203 = vmatpush1.xpose.msra.mxu0 %v170
  %204 = vmatprep.subr.mxu0 0.0
  %205 = vmatpush2.xpose.msra.mxu0 0.0
  %206 = vmatprep.subr.mxu0 0.0
  %207 = vmatpush2.xpose.msra.mxu0 0.0
  %208 = vmatprep.subr.mxu0 0.0
  %209 = vmatpush2.xpose.msra.mxu0 0.0
  %210 = vmatprep.subr.mxu0 0.0
  %211 = vmatpush2.xpose.msra.mxu0 0.0
  %212 = vmatprep.subr.mxu0 0.0
  %213 = vmatpush2.xpose.msra.mxu0 0.0
  %214 = vmatprep.subr.mxu0 0.0
  %215 = vmatpush2.xpose.msra.mxu0 0.0
  %216 = vmatprep.subr.mxu0 0.0
  %217 = vmatpush2.xpose.msra.mxu0 0.0
  %218 = vmatprep.subr.mxu0 0.0
  %219 = vmatpush2.xpose.msra.mxu0 0.0
  %220 = vmatprep.subr.mxu0 0.0
  %221 = vmatpush2.xpose.msra.mxu0 0.0
  %222 = vmatprep.subr.mxu0 0.0
  %223 = vmatpush2.xpose.msra.mxu0 0.0
  %224 = vmatprep.subr.mxu0 0.0
  %225 = vmatpush2.xpose.msra.mxu0 0.0
  %226 = vmatprep.subr.mxu0 0.0
  %227 = vmatpush2.xpose.msra.mxu0 0.0
  %228 = vmatprep.subr.mxu0 0.0
  %229 = vmatpush2.xpose.msra.mxu0 0.0
  %230 = vmatprep.subr.mxu0 0.0
  %231 = vmatpush2.xpose.msra.mxu0 0.0
  %232 = vmatprep.subr.mxu0 0.0
  %233 = vmatpush2.xpose.msra.mxu0 0.0
  %234 = vmatprep.subr.mxu0 0.0
  %235 = vmatpush2.xpose.msra.mxu0 0.0
  %236 = vmatprep.mubr.f32.mxu0 0.0
  %237 = vmatmul.mubr.f32.gmra.mxu0 %v168
  %v238 = vpop.f32.mrf.mxu0
  %v239 = vadd.f32 0.0, %v238
  %v240 = vpop.f32.mrf.mxu0
  %241 = vdwg.mxu0
  %243 = vrot.lane.b32.xlu0 %v162, 124
  %v244 = vpop.permute.xlu0 %243
  %v245 = vsel %vm14, %v162, 0
  %v247 = vsel %vm14, %v244, 0
  %249 = vmatprep.subr.mxu0 0.0
  %250 = vmatpush1.xpose.msra.mxu0 0.0
  %251 = vmatprep.subr.mxu0 0.0
  %252 = vmatpush1.xpose.msra.mxu0 0.0
  %253 = vmatprep.subr.mxu0 0.0
  %254 = vmatpush1.xpose.msra.mxu0 0.0
  %255 = vmatprep.subr.mxu0 0.0
  %256 = vmatpush1.xpose.msra.mxu0 0.0
  %257 = vmatprep.subr.mxu0 0.0
  %258 = vmatpush1.xpose.msra.mxu0 0.0
  %259 = vmatprep.subr.mxu0 0.0
  %260 = vmatpush1.xpose.msra.mxu0 0.0
  %261 = vmatprep.subr.mxu0 0.0
  %262 = vmatpush1.xpose.msra.mxu0 0.0
  %263 = vmatprep.subr.mxu0 0.0
  %264 = vmatpush1.xpose.msra.mxu0 0.0
  %265 = vmatprep.subr.mxu0 0.0
  %266 = vmatpush1.xpose.msra.mxu0 0.0
  %267 = vmatprep.subr.mxu0 0.0
  %268 = vmatpush1.xpose.msra.mxu0 0.0
  %269 = vmatprep.subr.mxu0 0.0
  %270 = vmatpush1.xpose.msra.mxu0 0.0
  %271 = vmatprep.subr.mxu0 0.0
  %272 = vmatpush1.xpose.msra.mxu0 0.0
  %273 = vmatprep.subr.mxu0 0.0
  %274 = vmatpush1.xpose.msra.mxu0 0.0
  %275 = vmatprep.subr.mxu0 0.0
  %276 = vmatpush1.xpose.msra.mxu0 0.0
  %277 = vmatprep.subr.mxu0 0.0
  %278 = vmatpush1.xpose.msra.mxu0 0.0
  %279 = vmatprep.subr.mxu0 0.0
  %280 = vmatpush1.xpose.msra.mxu0 %v247
  %281 = vmatprep.subr.mxu0 0.0
  %282 = vmatpush2.xpose.msra.mxu0 0.0
  %283 = vmatprep.subr.mxu0 0.0
  %284 = vmatpush2.xpose.msra.mxu0 0.0
  %285 = vmatprep.subr.mxu0 0.0
  %286 = vmatpush2.xpose.msra.mxu0 0.0
  %287 = vmatprep.subr.mxu0 0.0
  %288 = vmatpush2.xpose.msra.mxu0 0.0
  %289 = vmatprep.subr.mxu0 0.0
  %290 = vmatpush2.xpose.msra.mxu0 0.0
  %291 = vmatprep.subr.mxu0 0.0
  %292 = vmatpush2.xpose.msra.mxu0 0.0
  %293 = vmatprep.subr.mxu0 0.0
  %294 = vmatpush2.xpose.msra.mxu0 0.0
  %295 = vmatprep.subr.mxu0 0.0
  %296 = vmatpush2.xpose.msra.mxu0 0.0
  %297 = vmatprep.subr.mxu0 0.0
  %298 = vmatpush2.xpose.msra.mxu0 0.0
  %299 = vmatprep.subr.mxu0 0.0
  %300 = vmatpush2.xpose.msra.mxu0 0.0
  %301 = vmatprep.subr.mxu0 0.0
  %302 = vmatpush2.xpose.msra.mxu0 0.0
  %303 = vmatprep.subr.mxu0 0.0
  %304 = vmatpush2.xpose.msra.mxu0 0.0
  %305 = vmatprep.subr.mxu0 0.0
  %306 = vmatpush2.xpose.msra.mxu0 0.0
  %307 = vmatprep.subr.mxu0 0.0
  %308 = vmatpush2.xpose.msra.mxu0 0.0
  %309 = vmatprep.subr.mxu0 0.0
  %310 = vmatpush2.xpose.msra.mxu0 0.0
  %311 = vmatprep.subr.mxu0 0.0
  %312 = vmatpush2.xpose.msra.mxu0 0.0
  %313 = vmatprep.mubr.f32.mxu0 0.0
  %314 = vmatmul.mubr.f32.gmra.mxu0 %v245
  %v315 = vpop.f32.mrf.mxu0
  %v316 = vadd.f32 0.0, %v315
  %v317 = vpop.f32.mrf.mxu0
  %318 = vdwg.mxu0
  %v319 = vmul.f32 %v239, 0.5
  %v320 = vmul.f32 %v316, 0.5
  %v321 = vlaneseq
  %v322 = vshrl.u32 %v321, 7
  %v323 = vlaneseq
  %v324 = vand.u32 %v323, 127
  %vm325 = vcmp.ge.s32.totalorder %v322, %v324
  %v326 = vsel %vm325, 1, 0
  %vm327 = vcmp.eq.s32.totalorder %v326, 1
  %v328 = vsel %vm327, %v319, -1e+30
  %v329 = vsel %vm327, %v320, -1e+30
  %vm330 = vcmask 64512
  %v331 = vsel %vm330, %v328, -inf
  %332 = vmax.xlane.f32.xlu0 %v331
  %v333 = vpop.xlane.xlu0 %332
  %v334 = vsel %vm330, %v329, -inf
  %335 = vmax.xlane.f32.xlu0 %v334
  %v336 = vpop.xlane.xlu0 %335
  %v337 = vsub.f32 %v328, %v333
  %v338 = vsub.f32 %v329, %v336
  %v339 = vmul.f32 %v337, 1.442695
  %v340 = vpow.pop %v339
  %v341 = vmul.f32 %v338, 1.442695
  %v342 = vpow.pop %v341
  %v343 = vsel %vm330, %v340, 0.0
  %344 = vadd.xlane.f32.xlu0 %v343
  %v345 = vpop.xlane.xlu0 %344
  %v346 = vsel %vm330, %v342, 0.0
  %347 = vadd.xlane.f32.xlu0 %v346
  %v348 = vpop.xlane.xlu0 %347
  %v349 = vrcp.pop %v345
  %v350 = vrcp.pop %v348
  %v351 = vmul.f32 %v340, %v349
  %v352 = vmul.f32 %v342, %v350
  %353 = vrot.lane.b32.xlu0 %v89, 120
  %v354 = vpop.permute.xlu0 %353
  %v357 = vsel %vm330, %v351, 0
  %359 = vmatprep.subr.mxu0 0.0
  %360 = vmatpush1.msra.mxu0 0.0
  %361 = vmatprep.subr.mxu0 0.0
  %362 = vmatpush1.msra.mxu0 0.0
  %363 = vmatprep.subr.mxu0 0.0
  %364 = vmatpush1.msra.mxu0 0.0
  %365 = vmatprep.subr.mxu0 0.0
  %366 = vmatpush1.msra.mxu0 0.0
  %367 = vmatprep.subr.mxu0 0.0
  %368 = vmatpush1.msra.mxu0 0.0
  %369 = vmatprep.subr.mxu0 0.0
  %370 = vmatpush1.msra.mxu0 0.0
  %371 = vmatprep.subr.mxu0 0.0
  %372 = vmatpush1.msra.mxu0 0.0
  %373 = vmatprep.subr.mxu0 0.0
  %374 = vmatpush1.msra.mxu0 0.0
  %375 = vmatprep.subr.mxu0 0.0
  %376 = vmatpush1.msra.mxu0 0.0
  %377 = vmatprep.subr.mxu0 0.0
  %378 = vmatpush1.msra.mxu0 0.0
  %379 = vmatprep.subr.mxu0 0.0
  %380 = vmatpush1.msra.mxu0 0.0
  %381 = vmatprep.subr.mxu0 0.0
  %382 = vmatpush1.msra.mxu0 0.0
  %383 = vmatprep.subr.mxu0 0.0
  %384 = vmatpush1.msra.mxu0 0.0
  %385 = vmatprep.subr.mxu0 0.0
  %386 = vmatpush1.msra.mxu0 0.0
  %387 = vmatprep.subr.mxu0 0.0
  %388 = vmatpush1.msra.mxu0 0.0
  %389 = vmatprep.subr.mxu0 0.0
  %390 = vmatpush1.msra.mxu0 %v354
  %391 = vmatprep.subr.mxu0 0.0
  %392 = vmatpush2.msra.mxu0 0.0
  %393 = vmatprep.subr.mxu0 0.0
  %394 = vmatpush2.msra.mxu0 0.0
  %395 = vmatprep.subr.mxu0 0.0
  %396 = vmatpush2.msra.mxu0 0.0
  %397 = vmatprep.subr.mxu0 0.0
  %398 = vmatpush2.msra.mxu0 0.0
  %399 = vmatprep.subr.mxu0 0.0
  %400 = vmatpush2.msra.mxu0 0.0
  %401 = vmatprep.subr.mxu0 0.0
  %402 = vmatpush2.msra.mxu0 0.0
  %403 = vmatprep.subr.mxu0 0.0
  %404 = vmatpush2.msra.mxu0 0.0
  %405 = vmatprep.subr.mxu0 0.0
  %406 = vmatpush2.msra.mxu0 0.0
  %407 = vmatprep.subr.mxu0 0.0
  %408 = vmatpush2.msra.mxu0 0.0
  %409 = vmatprep.subr.mxu0 0.0
  %410 = vmatpush2.msra.mxu0 0.0
  %411 = vmatprep.subr.mxu0 0.0
  %412 = vmatpush2.msra.mxu0 0.0
  %413 = vmatprep.subr.mxu0 0.0
  %414 = vmatpush2.msra.mxu0 0.0
  %415 = vmatprep.subr.mxu0 0.0
  %416 = vmatpush2.msra.mxu0 0.0
  %417 = vmatprep.subr.mxu0 0.0
  %418 = vmatpush2.msra.mxu0 0.0
  %419 = vmatprep.subr.mxu0 0.0
  %420 = vmatpush2.msra.mxu0 0.0
  %421 = vmatprep.subr.mxu0 0.0
  %422 = vmatpush2.msra.mxu0 0.0
  %423 = vmatprep.mubr.f32.mxu0 0.0
  %424 = vmatmul.mubr.f32.gmra.mxu0 %v357
  %v425 = vpop.f32.mrf.mxu0
  %v426 = vadd.f32 0.0, %v425
  %v427 = vpop.f32.mrf.mxu0
  %428 = vdwg.mxu0
  %429 = vrot.lane.b32.xlu0 %v162, 120
  %v430 = vpop.permute.xlu0 %429
  %v433 = vsel %vm330, %v352, 0
  %435 = vmatprep.subr.mxu0 0.0
  %436 = vmatpush1.msra.mxu0 0.0
  %437 = vmatprep.subr.mxu0 0.0
  %438 = vmatpush1.msra.mxu0 0.0
  %439 = vmatprep.subr.mxu0 0.0
  %440 = vmatpush1.msra.mxu0 0.0
  %441 = vmatprep.subr.mxu0 0.0
  %442 = vmatpush1.msra.mxu0 0.0
  %443 = vmatprep.subr.mxu0 0.0
  %444 = vmatpush1.msra.mxu0 0.0
  %445 = vmatprep.subr.mxu0 0.0
  %446 = vmatpush1.msra.mxu0 0.0
  %447 = vmatprep.subr.mxu0 0.0
  %448 = vmatpush1.msra.mxu0 0.0
  %449 = vmatprep.subr.mxu0 0.0
  %450 = vmatpush1.msra.mxu0 0.0
  %451 = vmatprep.subr.mxu0 0.0
  %452 = vmatpush1.msra.mxu0 0.0
  %453 = vmatprep.subr.mxu0 0.0
  %454 = vmatpush1.msra.mxu0 0.0
  %455 = vmatprep.subr.mxu0 0.0
  %456 = vmatpush1.msra.mxu0 0.0
  %457 = vmatprep.subr.mxu0 0.0
  %458 = vmatpush1.msra.mxu0 0.0
  %459 = vmatprep.subr.mxu0 0.0
  %460 = vmatpush1.msra.mxu0 0.0
  %461 = vmatprep.subr.mxu0 0.0
  %462 = vmatpush1.msra.mxu0 0.0
  %463 = vmatprep.subr.mxu0 0.0
  %464 = vmatpush1.msra.mxu0 0.0
  %465 = vmatprep.subr.mxu0 0.0
  %466 = vmatpush1.msra.mxu0 %v430
  %467 = vmatprep.subr.mxu0 0.0
  %468 = vmatpush2.msra.mxu0 0.0
  %469 = vmatprep.subr.mxu0 0.0
  %470 = vmatpush2.msra.mxu0 0.0
  %471 = vmatprep.subr.mxu0 0.0
  %472 = vmatpush2.msra.mxu0 0.0
  %473 = vmatprep.subr.mxu0 0.0
  %474 = vmatpush2.msra.mxu0 0.0
  %475 = vmatprep.subr.mxu0 0.0
  %476 = vmatpush2.msra.mxu0 0.0
  %477 = vmatprep.subr.mxu0 0.0
  %478 = vmatpush2.msra.mxu0 0.0
  %479 = vmatprep.subr.mxu0 0.0
  %480 = vmatpush2.msra.mxu0 0.0
  %481 = vmatprep.subr.mxu0 0.0
  %482 = vmatpush2.msra.mxu0 0.0
  %483 = vmatprep.subr.mxu0 0.0
  %484 = vmatpush2.msra.mxu0 0.0
  %485 = vmatprep.subr.mxu0 0.0
  %486 = vmatpush2.msra.mxu0 0.0
  %487 = vmatprep.subr.mxu0 0.0
  %488 = vmatpush2.msra.mxu0 0.0
  %489 = vmatprep.subr.mxu0 0.0
  %490 = vmatpush2.msra.mxu0 0.0
  %491 = vmatprep.subr.mxu0 0.0
  %492 = vmatpush2.msra.mxu0 0.0
  %493 = vmatprep.subr.mxu0 0.0
  %494 = vmatpush2.msra.mxu0 0.0
  %495 = vmatprep.subr.mxu0 0.0
  %496 = vmatpush2.msra.mxu0 0.0
  %497 = vmatprep.subr.mxu0 0.0
  %498 = vmatpush2.msra.mxu0 0.0
  %499 = vmatprep.mubr.f32.mxu0 0.0
  %500 = vmatmul.mubr.f32.gmra.mxu0 %v433
  %v501 = vpop.f32.mrf.mxu0
  %v502 = vadd.f32 0.0, %v501
  %v503 = vpop.f32.mrf.mxu0
  %504 = vdwg.mxu0
  %505 = vst.msk [vmem:[%s2] sm:$0xff] %vm14, %v426
  %506 = vst.msk [vmem:[%s2 + $0x8] sm:$0xff] %vm14, %v502
  // Predicated region
  $region10: #{tpu_custom_call.1} parent=0 // pred_check
    _
  $region11: #{tpu_custom_call.1} parent=0 // pred_check_branch
    %508 = sbr.rel (0) target = $region13
  $region12: #{tpu_custom_call.1} parent=0 // pred_region
    _
  $region13: #{tpu_custom_call.1} parent=0 // pred_fallthru
    _
  // Predicated region
  $region14: #{tpu_custom_call.1} parent=0 // pred_check
    _
  $region15: #{tpu_custom_call.1} parent=0 // pred_check_branch
    %510 = sbr.rel (0) target = $region17
  $region16: #{tpu_custom_call.1} parent=0 // pred_region
    _
  $region17: #{tpu_custom_call.1} parent=0 // pred_fallthru
    _

</llo_original>
